<compile_context>
chip_gen: v7x
topology: tpu7x:2x2x1
jax: 0.10.0
libtpu: 0.0.40
codegen_flags: <defaults>
</compile_context>

<pallas_src>
import jax
import jax.numpy as jnp
from jax import lax
from jax.experimental import pallas as pl
from jax.experimental.pallas import tpu as pltpu


def _round_up(x, m):
    return ((x + m - 1) // m) * m


def _make_kernel(*, seq_tile, n_chunks, s_pad, t_rows, eps=1e-12):
    chunk = seq_tile // n_chunks

    def kernel(wid_ref,               # SMEM  (B*S_pad,) int32  [scalar prefetch]
               tid_ref,               # VMEM  (seq_tile, 1) int32
               word_hbm,              # ANY   (V, H) word table in HBM
               pos_ref,               # VMEM  (seq_tile, H) position rows (pipelined)
               type_ref,              # VMEM  (t_rows, H) token-type table (resident)
               gamma_ref, beta_ref,   # VMEM  (1, H)
               out_ref,               # VMEM  (seq_tile, H)
               wbuf,                  # VMEM  scratch (seq_tile, H): gathered word rows
               wsem):                 # DMA semaphores (n_chunks,)
        b = pl.program_id(0)
        s = pl.program_id(1)
        base = b * s_pad + s * seq_tile      # flat token index of this tile's row 0

        def issue(c):                        # start all row DMAs of chunk c
            row0 = c * chunk
            @pl.loop(0, chunk)
            def _(t):
                wid = wid_ref[base + row0 + t]
                pltpu.make_async_copy(word_hbm.at[pl.ds(wid, 1)],
                                      wbuf.at[pl.ds(row0 + t, 1)],
                                      wsem.at[c]).start()

        def wait(c):                         # ONE wait per chunk (bytes-counted sem)
            row0 = c * chunk
            pltpu.make_async_copy(word_hbm.at[pl.ds(0, chunk)],
                                  wbuf.at[pl.ds(row0, chunk)],
                                  wsem.at[c]).wait()

        gamma_f = gamma_ref[...].astype(jnp.float32)
        beta_f = beta_ref[...].astype(jnp.float32)

        def compute(c):
            row0 = c * chunk
            w = wbuf[pl.ds(row0, chunk), :].astype(jnp.float32)
            p = pos_ref[pl.ds(row0, chunk), :].astype(jnp.float32)
            ids = tid_ref[pl.ds(row0, chunk), :]                       # (chunk, 1)
            onehot = ids == lax.broadcasted_iota(jnp.int32, (chunk, t_rows), 1)
            te = jnp.dot(onehot.astype(type_ref.dtype), type_ref[...],
                         preferred_element_type=jnp.float32)
            x = w + p + te
            mu = jnp.mean(x, axis=-1, keepdims=True)
            var = jnp.mean(jnp.square(x - mu), axis=-1, keepdims=True)
            y = (x - mu) * lax.rsqrt(var + eps)
            y = y * gamma_f + beta_f
            out_ref[pl.ds(row0, chunk), :] = y.astype(out_ref.dtype)

        # Chunked software pipeline: issue chunk c+1 before waiting/computing c,
        # so the word-row gather overlaps the LayerNorm.  Per-chunk semaphores
        # keep the waits race-free.  Static unroll (n_chunks <= 4).
        issue(0)
        for c in range(n_chunks):
            if c + 1 < n_chunks:
                issue(c + 1)
            wait(c)
            compute(c)

    return kernel


def bert_embeddings(input_ids, token_type_ids, params, *, token_tile=512):
    """input_ids, token_type_ids: [B, S] int. Returns embeddings [B, S, H]."""
    assert token_tile % 8 == 0, "token_tile must be a multiple of 8"
    B, S = input_ids.shape
    word_table = params["word_embeddings"]           # (V, H)
    pos_table = params["position_embeddings"]        # (P, H)
    type_table = params["token_area_embeddings"]     # (T, H)
    H = word_table.shape[1]
    gamma = params["ln_gamma"].reshape(1, H)
    beta = params["ln_beta"].reshape(1, H)

    # Sequence tiling: a tile never crosses a sequence boundary, so positions
    # inside a tile are contiguous and come in via a plain BlockSpec.
    seq_tile = token_tile if S >= token_tile else _round_up(S, 8)
    s_pad = _round_up(S, seq_tile)
    num_s = s_pad // seq_tile

    if seq_tile % 32 == 0:
        n_chunks = 4
    elif seq_tile % 16 == 0:
        n_chunks = 2
    else:
        n_chunks = 1

    # Pad the position table so every (seq_tile, H) block read is in range.
    P = pos_table.shape[0]
    if P < s_pad:
        pos_table = jnp.concatenate(
            [pos_table, jnp.zeros((s_pad - P, H), pos_table.dtype)], axis=0)

    # Token-type table stays resident in VMEM; pad rows to a multiple of 8.
    t_rows = _round_up(type_table.shape[0], 8)
    if t_rows > type_table.shape[0]:
        type_table = jnp.concatenate(
            [type_table,
             jnp.zeros((t_rows - type_table.shape[0], H), type_table.dtype)], axis=0)

    word_ids = input_ids.astype(jnp.int32)
    if token_type_ids is None:
        type_ids = jnp.zeros((B, S), jnp.int32)
    else:
        type_ids = token_type_ids.astype(jnp.int32)
    if s_pad > S:
        pad = ((0, 0), (0, s_pad - S))
        word_ids = jnp.pad(word_ids, pad)   # id 0 is a valid (padding) row
        type_ids = jnp.pad(type_ids, pad)
    word_ids_flat = word_ids.reshape(B * s_pad)
    type_ids_col = type_ids.reshape(B * s_pad, 1)

    kernel = _make_kernel(seq_tile=seq_tile, n_chunks=n_chunks,
                          s_pad=s_pad, t_rows=t_rows)

    out = pl.pallas_call(
        kernel,
        out_shape=jax.ShapeDtypeStruct((B * s_pad, H), word_table.dtype),
        grid_spec=pltpu.PrefetchScalarGridSpec(
            num_scalar_prefetch=1,                     # only word ids in SMEM
            grid=(B, num_s),
            in_specs=[
                pl.BlockSpec((seq_tile, 1),
                             lambda b, s, wid: (b * num_s + s, 0)),      # type ids
                pl.BlockSpec(memory_space=pl.ANY),                       # word table (HBM)
                pl.BlockSpec((seq_tile, H), lambda b, s, wid: (s, 0)),   # position rows
                pl.BlockSpec((t_rows, H), lambda b, s, wid: (0, 0)),     # type table
                pl.BlockSpec((1, H), lambda b, s, wid: (0, 0)),          # LN gamma
                pl.BlockSpec((1, H), lambda b, s, wid: (0, 0)),          # LN beta
            ],
            out_specs=pl.BlockSpec((seq_tile, H),
                                   lambda b, s, wid: (b * num_s + s, 0)),
            scratch_shapes=[
                pltpu.VMEM((seq_tile, H), word_table.dtype),   # gathered word rows
                pltpu.SemaphoreType.DMA((n_chunks,)),          # per-chunk DMA sems
            ],
        ),
        compiler_params=pltpu.CompilerParams(
            dimension_semantics=("parallel", "parallel"),
            vmem_limit_bytes=48 * 1024 * 1024,
        ),
    )(word_ids_flat, type_ids_col, word_table, pos_table, type_table, gamma, beta)

    return out.reshape(B, s_pad, H)[:, :S, :]


def _reference(input_ids, token_type_ids, params):
    """Plain-JAX reference of the same forward, for verification."""
    B, S = input_ids.shape
    if token_type_ids is None:
        token_type_ids = jnp.zeros_like(input_ids)
    we = params["word_embeddings"][input_ids]
    pe = params["position_embeddings"][jnp.arange(S)][None, :, :]
    te = params["token_area_embeddings"][token_type_ids]
    x = we + pe + te
    mu = jnp.mean(x, axis=-1, keepdims=True)
    var = jnp.mean(jnp.square(x - mu), axis=-1, keepdims=True)
    y = (x - mu) / jnp.sqrt(var + 1e-12)
    return y * params["ln_gamma"] + params["ln_beta"]


if __name__ == "__main__":
    B, S, H = 2, 8, 32            # small synthetic config
    VOCAB, MAX_POS = 64, 16

    key = jax.random.PRNGKey(0)
    keys = jax.random.split(key, 5)

    input_ids = jax.random.randint(keys[0], (B, S), 0, VOCAB, dtype=jnp.int32)
    token_type_ids = jax.random.randint(keys[1], (B, S), 0, 2, dtype=jnp.int32)

    word_emb = jax.random.normal(keys[2], (VOCAB, H), dtype=jnp.float32) * 0.05
    pos_emb = jax.random.normal(keys[3], (MAX_POS, H), dtype=jnp.float32) * 0.05
    type_emb = jax.random.normal(keys[4], (MAX_POS, H), dtype=jnp.float32) * 0.05
    # padding_idx=0 rows are zero at init, as in nn.Embedding(padding_idx=0)
    word_emb = word_emb.at[0].set(0.0)
    pos_emb = pos_emb.at[0].set(0.0)
    type_emb = type_emb.at[0].set(0.0)

    params = {
        "word_embeddings": word_emb,
        "position_embeddings": pos_emb,
        "token_area_embeddings": type_emb,
        "ln_gamma": jnp.ones((H,), dtype=jnp.float32),
        "ln_beta": jnp.zeros((H,), dtype=jnp.float32),
    }

    out = bert_embeddings(input_ids, token_type_ids, params)
    out = jax.block_until_ready(out)

    ref = _reference(input_ids, token_type_ids, params)
    assert out.shape == (B, S, H)
    assert jnp.allclose(out, ref, atol=1e-4, rtol=1e-4), "mismatch vs reference"

    print("KERNEL_OK")
</pallas_src>

<mosaic_0001>
module attributes {stable_mosaic.version = 11 : i64} {
  func.func @kernel(%arg0: i32, %arg1: i32, %arg2: memref<16xi32, #tpu.memory_space<smem>>, %arg3: memref<8x1xi32, #tpu.memory_space<vmem>>, %arg4: memref<64x32xf32, #tpu.memory_space<any>>, %arg5: memref<8x32xf32, #tpu.memory_space<vmem>>, %arg6: memref<16x32xf32, #tpu.memory_space<vmem>>, %arg7: memref<1x32xf32, #tpu.memory_space<vmem>>, %arg8: memref<1x32xf32, #tpu.memory_space<vmem>>, %arg9: memref<8x32xf32, #tpu.memory_space<vmem>>, %arg10: memref<8x32xf32, #tpu.memory_space<vmem>>, %arg11: memref<1x!tpu.dma_semaphore, #tpu.memory_space<semaphore_mem>>) attributes {dimension_semantics = [#tpu.dimension_semantics<parallel>, #tpu.dimension_semantics<parallel>], iteration_bounds = array<i64: 2, 1>, scalar_prefetch = 1 : i64, scratch_operands = 2 : i64, tpu.core_type = #tpu.core_type<tc>, window_params = [{transform_indices = @transform_0, window_bounds = array<i64: 8, 1>}, {}, {transform_indices = @transform_2, window_bounds = array<i64: 8, 32>}, {pipeline_mode = #tpu.pipeline_mode<synchronous>, transform_indices = @transform_3, window_bounds = array<i64: 16, 32>}, {pipeline_mode = #tpu.pipeline_mode<synchronous>, transform_indices = @transform_4, window_bounds = array<i64: 1, 32>}, {pipeline_mode = #tpu.pipeline_mode<synchronous>, transform_indices = @transform_5, window_bounds = array<i64: 1, 32>}, {transform_indices = @transform_6, window_bounds = array<i64: 8, 32>}]} {
    %c8_i32 = arith.constant 8 : i32
    %0 = arith.muli %arg0, %c8_i32 : i32
    %c8_i32_0 = arith.constant 8 : i32
    %1 = arith.muli %arg1, %c8_i32_0 : i32
    %2 = arith.addi %0, %1 : i32
    %c0 = arith.constant 0 : index
    %c0_1 = arith.constant 0 : index
    %3 = vector.load %arg7[%c0, %c0_1] : memref<1x32xf32, #tpu.memory_space<vmem>>, vector<1x32xf32>
    %c0_2 = arith.constant 0 : index
    %c0_3 = arith.constant 0 : index
    %4 = vector.load %arg8[%c0_2, %c0_3] : memref<1x32xf32, #tpu.memory_space<vmem>>, vector<1x32xf32>
    %c0_i32 = arith.constant 0 : i32
    %c8_i32_4 = arith.constant 8 : i32
    %5 = arith.addi %c0_i32, %c8_i32_4 : i32
    %c1_i32 = arith.constant 1 : i32
    scf.for %arg12 = %c0_i32 to %5 step %c1_i32  : i32 {
      %c1_i32_26 = arith.constant 1 : i32
      %45 = arith.muli %arg12, %c1_i32_26 : i32
      %c0_i32_27 = arith.constant 0 : i32
      %46 = arith.addi %c0_i32_27, %45 : i32
      %c0_i32_28 = arith.constant 0 : i32
      %47 = arith.addi %2, %c0_i32_28 : i32
      %48 = arith.addi %47, %46 : i32
      %49 = arith.index_cast %48 : i32 to index
      %50 = memref.load %arg2[%49] : memref<16xi32, #tpu.memory_space<smem>>
      %c0_i32_29 = arith.constant 0 : i32
      %51 = arith.addi %c0_i32_29, %46 : i32
      %c0_i32_30 = arith.constant 0 : i32
      %c0_i32_31 = arith.constant 0 : i32
      %52 = tpu.memref_slice %arg4[%50, %c0_i32_31] : memref<64x32xf32, #tpu.memory_space<any>> -> memref<1x32xf32, #tpu.memory_space<any>>
      %c0_i32_32 = arith.constant 0 : i32
      %53 = tpu.memref_slice %arg10[%51, %c0_i32_32] : memref<8x32xf32, #tpu.memory_space<vmem>> -> memref<1x32xf32, #tpu.memory_space<vmem>>
      %54 = tpu.memref_slice %arg11[%c0_i32_30] : memref<1x!tpu.dma_semaphore, #tpu.memory_space<semaphore_mem>> -> memref<1x!tpu.dma_semaphore, #tpu.memory_space<semaphore_mem>>
      %55 = tpu.memref_squeeze %54 : memref<1x!tpu.dma_semaphore, #tpu.memory_space<semaphore_mem>> -> memref<!tpu.dma_semaphore, #tpu.memory_space<semaphore_mem>>
      tpu.enqueue_dma source(%52 : memref<1x32xf32, #tpu.memory_space<any>>) target(%53 : memref<1x32xf32, #tpu.memory_space<vmem>>) target_semaphore(%55 : memref<!tpu.dma_semaphore, #tpu.memory_space<semaphore_mem>>)
    }
    %c8_i32_5 = arith.constant 8 : i32
    %c0_i32_6 = arith.constant 0 : i32
    %c0_i32_7 = arith.constant 0 : i32
    %c0_i32_8 = arith.constant 0 : i32
    %6 = tpu.memref_slice %arg4[%c0_i32_7, %c0_i32_8] : memref<64x32xf32, #tpu.memory_space<any>> -> memref<8x32xf32, #tpu.memory_space<any>>
    %c0_i32_9 = arith.constant 0 : i32
    %c0_i32_10 = arith.constant 0 : i32
    %7 = tpu.memref_slice %arg10[%c0_i32_9, %c0_i32_10] : memref<8x32xf32, #tpu.memory_space<vmem>> -> memref<8x32xf32, #tpu.memory_space<vmem>>
    %8 = tpu.memref_slice %arg11[%c0_i32_6] : memref<1x!tpu.dma_semaphore, #tpu.memory_space<semaphore_mem>> -> memref<1x!tpu.dma_semaphore, #tpu.memory_space<semaphore_mem>>
    %9 = tpu.memref_squeeze %8 : memref<1x!tpu.dma_semaphore, #tpu.memory_space<semaphore_mem>> -> memref<!tpu.dma_semaphore, #tpu.memory_space<semaphore_mem>>
    tpu.wait_dma2 semaphore(%9 : memref<!tpu.dma_semaphore, #tpu.memory_space<semaphore_mem>>) src(%6 : memref<8x32xf32, #tpu.memory_space<any>>) dst(%7 : memref<8x32xf32, #tpu.memory_space<vmem>>)
    %c0_11 = arith.constant 0 : index
    %c0_12 = arith.constant 0 : index
    %10 = vector.load %arg10[%c0_11, %c0_12] : memref<8x32xf32, #tpu.memory_space<vmem>>, vector<8x32xf32>
    %c0_13 = arith.constant 0 : index
    %c0_14 = arith.constant 0 : index
    %11 = vector.load %arg5[%c0_13, %c0_14] : memref<8x32xf32, #tpu.memory_space<vmem>>, vector<8x32xf32>
    %c0_15 = arith.constant 0 : index
    %c0_16 = arith.constant 0 : index
    %12 = vector.load %arg3[%c0_15, %c0_16] : memref<8x1xi32, #tpu.memory_space<vmem>>, vector<8x1xi32>
    %13 = tpu.iota {dimensions = array<i32: 1>} : vector<8x16xi32>
    %14 = vector.broadcast %12 : vector<8x1xi32> to vector<8x16xi32>
    %15 = arith.cmpi eq, %14, %13 : vector<8x16xi32>
    %16 = arith.extui %15 : vector<8x16xi1> to vector<8x16xi32>
    %17 = arith.sitofp %16 : vector<8x16xi32> to vector<8x16xf32>
    %c0_17 = arith.constant 0 : index
    %c0_18 = arith.constant 0 : index
    %18 = vector.load %arg6[%c0_17, %c0_18] : memref<16x32xf32, #tpu.memory_space<vmem>>, vector<16x32xf32>
    %cst = arith.constant dense<0.000000e+00> : vector<8x32xf32>
    %19 = tpu.matmul %17, %18, %cst {dimension_numbers = #tpu.dot_dimension_numbers<[1], [0], [0], [1], [0, 0, 1, 1], [], []>} : vector<8x16xf32>, vector<16x32xf32>, vector<8x32xf32> -> vector<8x32xf32>
    %20 = arith.addf %10, %11 : vector<8x32xf32>
    %21 = arith.addf %20, %19 : vector<8x32xf32>
    %cst_19 = arith.constant dense<0.000000e+00> : vector<8xf32>
    %22 = vector.multi_reduction <add>, %21, %cst_19 [1] : vector<8x32xf32> to vector<8xf32>
    %23 = vector.shape_cast %22 : vector<8xf32> to vector<8x1xf32>
    %cst_20 = arith.constant 3.200000e+01 : f32
    %24 = vector.broadcast %cst_20 : f32 to vector<8x1xf32>
    %25 = arith.divf %23, %24 : vector<8x1xf32>
    %26 = vector.broadcast %25 : vector<8x1xf32> to vector<8x32xf32>
    %27 = arith.subf %21, %26 : vector<8x32xf32>
    %28 = arith.mulf %27, %27 : vector<8x32xf32>
    %cst_21 = arith.constant dense<0.000000e+00> : vector<8xf32>
    %29 = vector.multi_reduction <add>, %28, %cst_21 [1] : vector<8x32xf32> to vector<8xf32>
    %30 = vector.shape_cast %29 : vector<8xf32> to vector<8x1xf32>
    %cst_22 = arith.constant 3.200000e+01 : f32
    %31 = vector.broadcast %cst_22 : f32 to vector<8x1xf32>
    %32 = arith.divf %30, %31 : vector<8x1xf32>
    %33 = vector.broadcast %25 : vector<8x1xf32> to vector<8x32xf32>
    %34 = arith.subf %21, %33 : vector<8x32xf32>
    %cst_23 = arith.constant 9.99999996E-13 : f32
    %35 = vector.broadcast %cst_23 : f32 to vector<8x1xf32>
    %36 = arith.addf %32, %35 : vector<8x1xf32>
    %37 = math.rsqrt %36 : vector<8x1xf32>
    %38 = vector.broadcast %37 : vector<8x1xf32> to vector<8x32xf32>
    %39 = arith.mulf %34, %38 : vector<8x32xf32>
    %40 = vector.broadcast %3 : vector<1x32xf32> to vector<8x32xf32>
    %41 = arith.mulf %39, %40 : vector<8x32xf32>
    %42 = vector.broadcast %4 : vector<1x32xf32> to vector<8x32xf32>
    %43 = arith.addf %41, %42 : vector<8x32xf32>
    %c0_24 = arith.constant 0 : index
    %c0_25 = arith.constant 0 : index
    %44 = vector.load %arg9[%c0_24, %c0_25] : memref<8x32xf32, #tpu.memory_space<vmem>>, vector<8x32xf32>
    tpu.vector_store %arg9[%c0_24, %c0_25], %43 {strides = array<i32>} : memref<8x32xf32, #tpu.memory_space<vmem>>, vector<8x32xf32>,
    return
  }
  func.func @transform_0(%arg0: i32, %arg1: i32, %arg2: memref<16xi32, #tpu.memory_space<smem>>) -> (i32, i32) {
    %c1_i32 = arith.constant 1 : i32
    %0 = arith.muli %arg0, %c1_i32 : i32
    %1 = arith.addi %0, %arg1 : i32
    %c0_i32 = arith.constant 0 : i32
    %c0_i32_0 = arith.constant 0 : i32
    return %1, %c0_i32 : i32, i32
  }
  func.func @transform_2(%arg0: i32, %arg1: i32, %arg2: memref<16xi32, #tpu.memory_space<smem>>) -> (i32, i32) {
    %c0_i32 = arith.constant 0 : i32
    %c0_i32_0 = arith.constant 0 : i32
    return %arg1, %c0_i32 : i32, i32
  }
  func.func @transform_3(%arg0: i32, %arg1: i32, %arg2: memref<16xi32, #tpu.memory_space<smem>>) -> (i32, i32) {
    %c0_i32 = arith.constant 0 : i32
    %c0_i32_0 = arith.constant 0 : i32
    %c0_i32_1 = arith.constant 0 : i32
    return %c0_i32, %c0_i32_0 : i32, i32
  }
  func.func @transform_4(%arg0: i32, %arg1: i32, %arg2: memref<16xi32, #tpu.memory_space<smem>>) -> (i32, i32) {
    %c0_i32 = arith.constant 0 : i32
    %c0_i32_0 = arith.constant 0 : i32
    %c0_i32_1 = arith.constant 0 : i32
    return %c0_i32, %c0_i32_0 : i32, i32
  }
  func.func @transform_5(%arg0: i32, %arg1: i32, %arg2: memref<16xi32, #tpu.memory_space<smem>>) -> (i32, i32) {
    %c0_i32 = arith.constant 0 : i32
    %c0_i32_0 = arith.constant 0 : i32
    %c0_i32_1 = arith.constant 0 : i32
    return %c0_i32, %c0_i32_0 : i32, i32
  }
  func.func @transform_6(%arg0: i32, %arg1: i32, %arg2: memref<16xi32, #tpu.memory_space<smem>>) -> (i32, i32) {
    %c1_i32 = arith.constant 1 : i32
    %0 = arith.muli %arg0, %c1_i32 : i32
    %1 = arith.addi %0, %arg1 : i32
    %c0_i32 = arith.constant 0 : i32
    %c0_i32_0 = arith.constant 0 : i32
    return %1, %c0_i32 : i32, i32
  }
}

</mosaic_0001>

<llo_original>
// kernel: tpu_custom_call.1
$region0: #{tpu_custom_call.1}
  #allocation0 [shape = 'u32[]', space=smem, size = 0x4, offset = 0x4, fixed_abs, tag = 'smem constant byte address 0x4 - core index']
  #allocation1 [shape = 'u32[144,128]{1,0:T(1,128)}', space=vmem, size = 0x12000, scoped, tag = 'internal scratch']
  #allocation2 [shape = 'f32[8,32]{1,0:T(8,128)}', space=vmem, size = 0x1000, scoped, tag = 'scratch operand']
  #allocation3 [shape = 's32[1]{0}', space=sflag, size = 0x4, scoped, tag = 'scratch operand']
  #allocation4 [shape = 's32[1]{0}', space=sflag, size = 0x4, scoped, tag = 'scoped memory for tpu_custom_call.1']
  #allocation5 [shape = 'u8[512]{0}', space=smem, size = 0x200, scoped, tag = 'prefetched SMEM operand 0']
  #allocation8 [shape = 's32[]', space=sflag, size = 0x4, offset = 0, fixed_abs, tag = 'sflag constant byte address 0x0 - dummy sync flag']
  %s0 = inlined_call_operand.vmem [shape: s32[16], index: 0, kind: input, shape index: {}]
  %s1 = inlined_call_operand.vmem [shape: s32[16,1], index: 1, kind: input, shape index: {}]
  %s2 = inlined_call_operand.vmem [shape: f32[64,32], index: 2, kind: input, shape index: {}]
  %s3 = inlined_call_operand.vmem [shape: f32[16,32], index: 3, kind: input, shape index: {}]
  %s4 = inlined_call_operand.vmem [shape: f32[16,32], index: 4, kind: input, shape index: {}]
  %s5 = inlined_call_operand.vmem [shape: f32[1,32], index: 5, kind: input, shape index: {}]
  %s6 = inlined_call_operand.vmem [shape: f32[1,32], index: 6, kind: input, shape index: {}]
  %s7 = inlined_call_operand.hbm [shape: f32[16,32], index: 7, kind: output, shape index: {}]
  %s8 = sld [smem:[#allocation0]]
  $region90: #{tpu_custom_call.1} parent=0
    _
  %s10 = ssub.s32 1, %s8
  %s11 = scalar_select 0, %s10, %s8
  %s12 = sshll.u32 %s0, 4
  %s13 = int_to_ptr.vmem [resolvable:$true] %s12
  %15 = dma.vmem_to_smem %s13, 16, [#allocation5], [#allocation4]
  %16 = dma.done [#allocation4], 16
  %17 = sfence
  $region1: #{tpu_custom_call.1} parent=0
    #allocation6 [shape = 'u8[8192]{0}', space=vmem, size = 0x2000, scoped, tag = 'output window, operand 0']
    #allocation7 [shape = 's32[2]{0}', space=sflag, size = 0x8, scoped, tag = 'scoped memory for tpu_custom_call.1']
    %18 = vsyncpa [#allocation7], 0
    %s19 = scalar_lea.sflag [#allocation7], 1
    %20 = vsyncpa %s19, 0
    loop: start=0, step=1, limit=4
    $region2: #{tpu_custom_call.1} parent=1 // loop_pre_header
      _
    $region3: #{tpu_custom_call.1} parent=1 // loop_header
      %s22 = sphi 0, %s26
      %p23 = scmp.ge.s32.totalorder %s22, 4
      %s29 = sphi 0, %s41
      %s30 = sphi 0, %s37
      %s31 = sphi 0, %s29
      %s32 = sphi 0, %s30
      %s33 = sphi 0, %s31
      %s34 = sphi 0, %s32
      %s46 = sphi 0, %s48
      %s49 = sphi 0, %s46
      %s50 = sphi 0, %s49
      %s66 = sphi 0, %s50
      %s72 = sphi 0, %s74
      %s75 = sphi 0, %s72
      %s76 = sphi 0, %s75
      %s92 = sphi 0, %s76
      %s96 = sphi 0, %s96
      %s98 = sphi 0, %s96
      %s99 = sphi 0, %s98
      %s113 = sphi 0, %s99
      %s117 = sphi 0, %s117
      %s119 = sphi 0, %s117
      %s120 = sphi 0, %s119
      %s134 = sphi 0, %s120
      %s138 = sphi 0, %s138
      %s140 = sphi 0, %s138
      %s141 = sphi 0, %s140
      %s155 = sphi 0, %s141
      %s163 = sphi 0, %s165
      %s166 = sphi 0, %s163
      %s167 = sphi 0, %s166
      %s183 = sphi 0, %s167
    $region4: #{tpu_custom_call.1} parent=1 // loop_header_branch
      %25 = sbr.rel (%p23) target = $region8
    $region5: #{tpu_custom_call.1} parent=1 // loop_body
      %s27 = ssub.s32 %s22, 1
      %s28 = ssub.s32 %s22, 2
      %s35 = sadd.s32 1, %s30
      %p36 = scmp.ge.s32.totalorder %s35, 1
      %s37 = scalar_select %p36, 0, %s35
      %s38 = sadd.s32 1, %s29
      %s39 = scalar_select %p36, %s38, %s29
      %p40 = scmp.ge.s32.totalorder %s39, 2
      %s41 = scalar_select %p40, 0, %s39
      %s42 = sadd.s32 %s29, %s30
      %s43 = sadd.s32 %s41, %s37
      %s44 = ssub.s32 %s42, %s43
      %p45 = scmp.eq.s32.totalorder %s44, 0
      %s47 = sadd.s32 %s46, 1
      %s48 = scalar_select %p45, %s46, %s47
      %p51 = pneg %p45
      %p52 = scmp.eq.s32.totalorder %s22, 1
      %p53 = por %p51, %p52
      %p54 = scmp.ne.s32.totalorder %s46, %s49
      %p55 = scmp.eq.s32.totalorder %s22, 0
      %p56 = por %p54, %p55
      %p57 = scmp.ne.s32.totalorder %s46, %s49
      %p58 = scmp.eq.s32.totalorder %s27, 1
      %p59 = por %p57, %p58
      %p60 = scmp.ne.s32.totalorder %s49, %s50
      %p61 = scmp.eq.s32.totalorder %s27, 0
      %p62 = por %p60, %p61
      %p63 = scmp.ne.s32.totalorder %s49, %s50
      %p64 = scmp.eq.s32.totalorder %s28, 1
      %p65 = por %p63, %p64
      %p67 = scmp.ne.s32.totalorder %s50, %s66
      %p68 = scmp.eq.s32.totalorder %s28, 0
      %p69 = por %p67, %p68
      %s70 = ssub.s32 %s30, %s37
      %p71 = scmp.eq.s32.totalorder %s70, 0
      %s73 = sadd.s32 %s72, 1
      %s74 = scalar_select %p71, %s72, %s73
      %p77 = pneg %p71
      %p78 = scmp.eq.s32.totalorder %s22, 1
      %p79 = por %p77, %p78
      %p80 = scmp.ne.s32.totalorder %s72, %s75
      %p81 = scmp.eq.s32.totalorder %s22, 0
      %p82 = por %p80, %p81
      %p83 = scmp.ne.s32.totalorder %s72, %s75
      %p84 = scmp.eq.s32.totalorder %s27, 1
      %p85 = por %p83, %p84
      %p86 = scmp.ne.s32.totalorder %s75, %s76
      %p87 = scmp.eq.s32.totalorder %s27, 0
      %p88 = por %p86, %p87
      %p89 = scmp.ne.s32.totalorder %s75, %s76
      %p90 = scmp.eq.s32.totalorder %s28, 1
      %p91 = por %p89, %p90
      %p93 = scmp.ne.s32.totalorder %s76, %s92
      %p94 = scmp.eq.s32.totalorder %s28, 0
      %p95 = por %p93, %p94
      %s97 = sadd.s32 %s96, 1
      %p100 = scmp.eq.s32.totalorder %s22, 1
      %p101 = scmp.ne.s32.totalorder %s96, %s98
      %p102 = scmp.eq.s32.totalorder %s22, 0
      %p103 = por %p101, %p102
      %p104 = scmp.ne.s32.totalorder %s96, %s98
      %p105 = scmp.eq.s32.totalorder %s27, 1
      %p106 = por %p104, %p105
      %p107 = scmp.ne.s32.totalorder %s98, %s99
      %p108 = scmp.eq.s32.totalorder %s27, 0
      %p109 = por %p107, %p108
      %p110 = scmp.ne.s32.totalorder %s98, %s99
      %p111 = scmp.eq.s32.totalorder %s28, 1
      %p112 = por %p110, %p111
      %p114 = scmp.ne.s32.totalorder %s99, %s113
      %p115 = scmp.eq.s32.totalorder %s28, 0
      %p116 = por %p114, %p115
      %s118 = sadd.s32 %s117, 1
      %p121 = scmp.eq.s32.totalorder %s22, 1
      %p122 = scmp.ne.s32.totalorder %s117, %s119
      %p123 = scmp.eq.s32.totalorder %s22, 0
      %p124 = por %p122, %p123
      %p125 = scmp.ne.s32.totalorder %s117, %s119
      %p126 = scmp.eq.s32.totalorder %s27, 1
      %p127 = por %p125, %p126
      %p128 = scmp.ne.s32.totalorder %s119, %s120
      %p129 = scmp.eq.s32.totalorder %s27, 0
      %p130 = por %p128, %p129
      %p131 = scmp.ne.s32.totalorder %s119, %s120
      %p132 = scmp.eq.s32.totalorder %s28, 1
      %p133 = por %p131, %p132
      %p135 = scmp.ne.s32.totalorder %s120, %s134
      %p136 = scmp.eq.s32.totalorder %s28, 0
      %p137 = por %p135, %p136
      %s139 = sadd.s32 %s138, 1
      %p142 = scmp.eq.s32.totalorder %s22, 1
      %p143 = scmp.ne.s32.totalorder %s138, %s140
      %p144 = scmp.eq.s32.totalorder %s22, 0
      %p145 = por %p143, %p144
      %p146 = scmp.ne.s32.totalorder %s138, %s140
      %p147 = scmp.eq.s32.totalorder %s27, 1
      %p148 = por %p146, %p147
      %p149 = scmp.ne.s32.totalorder %s140, %s141
      %p150 = scmp.eq.s32.totalorder %s27, 0
      %p151 = por %p149, %p150
      %p152 = scmp.ne.s32.totalorder %s140, %s141
      %p153 = scmp.eq.s32.totalorder %s28, 1
      %p154 = por %p152, %p153
      %p156 = scmp.ne.s32.totalorder %s141, %s155
      %p157 = scmp.eq.s32.totalorder %s28, 0
      %p158 = por %p156, %p157
      %s159 = sadd.s32 %s29, %s30
      %s160 = sadd.s32 %s41, %s37
      %s161 = ssub.s32 %s159, %s160
      %p162 = scmp.eq.s32.totalorder %s161, 0
      %s164 = sadd.s32 %s163, 1
      %s165 = scalar_select %p162, %s163, %s164
      %p168 = pneg %p162
      %p169 = scmp.eq.s32.totalorder %s22, 1
      %p170 = por %p168, %p169
      %p171 = scmp.ne.s32.totalorder %s163, %s166
      %p172 = scmp.eq.s32.totalorder %s22, 0
      %p173 = por %p171, %p172
      %p174 = scmp.ne.s32.totalorder %s163, %s166
      %p175 = scmp.eq.s32.totalorder %s27, 1
      %p176 = por %p174, %p175
      %p177 = scmp.ne.s32.totalorder %s166, %s167
      %p178 = scmp.eq.s32.totalorder %s27, 0
      %p179 = por %p177, %p178
      %p180 = scmp.ne.s32.totalorder %s166, %s167
      %p181 = scmp.eq.s32.totalorder %s28, 1
      %p182 = por %p180, %p181
      %p184 = scmp.ne.s32.totalorder %s167, %s183
      %p185 = scmp.eq.s32.totalorder %s28, 0
      %p186 = por %p184, %p185
      %p187 = scmp.le.s32.totalorder 1, %s22
      %p188 = scmp.lt.s32.totalorder %s22, 3
      %p189 = pnand %p187, %p188
      %p190 = pneg %p189
      // Predicated region
      $region9: #{tpu_custom_call.1} parent=5 // pred_check
        _
      $region10: #{tpu_custom_call.1} parent=5 // pred_check_branch
        %192 = sbr.rel (%p189) target = $region12
      $region11: #{tpu_custom_call.1} parent=5 // pred_region
        %s193 = ssub.s32 %s22, 1
        // Predicated region
        $region13: #{tpu_custom_call.1} parent=11 // pred_check
          %p194 = pneg %p88
        $region14: #{tpu_custom_call.1} parent=11 // pred_check_branch
          %196 = sbr.rel (%p194) target = $region16
        $region15: #{tpu_custom_call.1} parent=11 // pred_region
          %p197 = scmp.lt.s32.totalorder %s32, 1
          %s198 = scalar_select %p197, %s32, 1
          %s199 = smul.addr %s198, 8
          %s200 = scalar_lea.vmem %s3, %s199
        $region16: #{tpu_custom_call.1} parent=11 // pred_fallthru
          _
        // Predicated region
        $region17: #{tpu_custom_call.1} parent=11 // pred_check
          %p201 = pneg %p109
        $region18: #{tpu_custom_call.1} parent=11 // pred_check_branch
          %203 = sbr.rel (%p201) target = $region20
        $region19: #{tpu_custom_call.1} parent=11 // pred_region
          _
        $region20: #{tpu_custom_call.1} parent=11 // pred_fallthru
          _
        // Predicated region
        $region21: #{tpu_custom_call.1} parent=11 // pred_check
          %p204 = pneg %p130
        $region22: #{tpu_custom_call.1} parent=11 // pred_check_branch
          %206 = sbr.rel (%p204) target = $region24
        $region23: #{tpu_custom_call.1} parent=11 // pred_region
          _
        $region24: #{tpu_custom_call.1} parent=11 // pred_fallthru
          _
        // Predicated region
        $region25: #{tpu_custom_call.1} parent=11 // pred_check
          %p207 = pneg %p151
        $region26: #{tpu_custom_call.1} parent=11 // pred_check_branch
          %209 = sbr.rel (%p207) target = $region28
        $region27: #{tpu_custom_call.1} parent=11 // pred_region
          _
        $region28: #{tpu_custom_call.1} parent=11 // pred_fallthru
          _
      $region12: #{tpu_custom_call.1} parent=5 // pred_fallthru
        _
      %p210 = scmp.lt.s32.totalorder %s22, 2
      // Predicated region
      $region29: #{tpu_custom_call.1} parent=5 // pred_check
        %p211 = pneg %p210
      $region30: #{tpu_custom_call.1} parent=5 // pred_check_branch
        %213 = sbr.rel (%p211) target = $region32
      $region31: #{tpu_custom_call.1} parent=5 // pred_region
        // Predicated region
        $region33: #{tpu_custom_call.1} parent=31 // pred_check
          %p214 = pneg %p56
        $region34: #{tpu_custom_call.1} parent=31 // pred_check_branch
          %216 = sbr.rel (%p214) target = $region36
        $region35: #{tpu_custom_call.1} parent=31 // pred_region
          %s217 = sadd.s32 %s29, %s30
          %p218 = scmp.lt.s32.totalorder %s217, 1
          %s219 = scalar_select %p218, %s217, 1
          %s220 = smul.addr %s219, 8
          %s221 = scalar_lea.vmem %s1, %s220
          %s222 = sadd.s32 %s29, %s30
        $region36: #{tpu_custom_call.1} parent=31 // pred_fallthru
          _
      $region32: #{tpu_custom_call.1} parent=5 // pred_fallthru
        _
      %p223 = scmp.le.s32.totalorder 1, %s22
      %p224 = scmp.lt.s32.totalorder %s22, 3
      %p225 = pnand %p223, %p224
      %p226 = pneg %p225
      // Predicated region
      $region37: #{tpu_custom_call.1} parent=5 // pred_check
        _
      $region38: #{tpu_custom_call.1} parent=5 // pred_check_branch
        %228 = sbr.rel (%p225) target = $region40
      $region39: #{tpu_custom_call.1} parent=5 // pred_region
        %s229 = ssub.s32 %s22, 1
        %s230 = sadd.s32 %s31, %s32
        %p231 = scmp.lt.s32.totalorder %s230, 1
        %s232 = scalar_select %p231, %s230, 1
        %s233 = smul.addr %s232, 8
        %s234 = scalar_lea.vmem %s1, %s233
        %p235 = pneg %p62
        %p236 = pneg %p59
        %p237 = scmp.lt.s32.totalorder %s32, 1
        %s238 = scalar_select %p237, %s32, 1
        %s239 = smul.addr %s238, 8
        %s240 = scalar_lea.vmem %s3, %s239
        %p241 = pneg %p88
        %p242 = pneg %p85
        %p243 = pneg %p109
        %p244 = pneg %p106
        %p245 = pneg %p130
        %p246 = pneg %p127
        %p247 = pneg %p151
        %p248 = pneg %p148
        %p249 = pneg %p179
        %p250 = pneg %p176
        %s251 = sand.u32 %s166, 1
        %s252 = scalar_lea.sflag [#allocation7], %s251
        %s253 = sand.u32 %s166, 1
        %s254 = smul.addr %s253, 8
        %s255 = scalar_lea.vmem [#allocation6], %s254
        %s256 = sadd.s32 %s31, %s32
        %p257 = scmp.lt.s32.totalorder %s256, 1
        %s258 = scalar_select %p257, %s256, 1
        %s259 = smul.addr %s258, 8
        %s260 = scalar_lea.vmem %s1, %s259
        %s261 = sadd.s32 %s31, %s32
        %p262 = scmp.lt.s32.totalorder %s32, 1
        %s263 = scalar_select %p262, %s32, 1
        %s264 = smul.addr %s263, 8
        %s265 = scalar_lea.vmem %s3, %s264
        %s266 = sadd.s32 %s31, %s32
        %s267 = smul.u32 %s31, 8
        %s268 = smul.u32 %s32, 8
        %s269 = sadd.s32 %s267, %s268
        %v270 = vld [vmem:[%s5] sm:$0x1]
        %v271 = vld [vmem:[%s6] sm:$0x1]
        loop: start=0, step=1, limit=8
        $region41: #{tpu_custom_call.1} parent=39 // loop_pre_header
          _
        $region42: #{tpu_custom_call.1} parent=39 // loop_header
          %s273 = sphi 0, %s277
          %p274 = scmp.ge.s32.totalorder %s273, 8
        $region43: #{tpu_custom_call.1} parent=39 // loop_header_branch
          %276 = sbr.rel (%p274) target = $region47
        $region44: #{tpu_custom_call.1} parent=39 // loop_body
          %s278 = sadd.s32 %s269, %s273
          %s279 = sld [smem:[#allocation5 + %s278]]
          %s280 = scalar_lea.vmem %s2, %s279
          %s281 = scalar_lea.vmem [#allocation2], %s273
          %p283 = scmp.lt.u32.totalorder 1, 8
          %p284 = pneg %p283
          // Predicated region
          $region48: #{tpu_custom_call.1} parent=44 // pred_check
            _
          $region49: #{tpu_custom_call.1} parent=44 // pred_check_branch
            %286 = sbr.rel (%p283) target = $region51
          $region50: #{tpu_custom_call.1} parent=44 // pred_region
            %s301 = sand.u32 1, 7
            %p302 = scmp.eq.s32.totalorder %s301, 0
            %p303 = pneg %p302
            // Predicated region
            $region63: #{tpu_custom_call.1} parent=50 // pred_check
              _
            $region64: #{tpu_custom_call.1} parent=50 // pred_check_branch
              %305 = sbr.rel (%p302) target = $region66
            $region65: #{tpu_custom_call.1} parent=50 // pred_region
              %s306 = sand.u32 1, 7
              %s307 = ssub.s32 1, %s306
              %s308 = scalar_lea.vmem %s280, %s307
              %s309 = ssub.s32 1, %s306
              %s310 = scalar_lea.vmem %s281, %s309 [#allocation2]
              %s311 = sshllo.u32 0, %s306
              loop: start=0, step=1, limit=1
              $region67: #{tpu_custom_call.1} parent=65 // loop_pre_header
                _
              $region68: #{tpu_custom_call.1} parent=65 // loop_header
                %s313 = sphi 0, %s317
                %p314 = scmp.ge.s32.totalorder %s313, 1
                %s318 = sphi %s308, %s308
                %s319 = sphi %s310, %s310
              $region69: #{tpu_custom_call.1} parent=65 // loop_header_branch
                %316 = sbr.rel (%p314) target = $region73
              $region70: #{tpu_custom_call.1} parent=65 // loop_body
                %v320 = vld [vmem:[%s318] sm:%s311]
                %321 = vst [vmem:[%s319] sm:%s311] %v320
              $region71: #{tpu_custom_call.1} parent=65 // loop_footer
                %s317 = sadd.s32 1, %s313
              $region72: #{tpu_custom_call.1} parent=65 // loop_footer_branch
                %312 = sbr.rel target = $region68
              $region73: #{tpu_custom_call.1} parent=65 // loop_exit
                _
            $region66: #{tpu_custom_call.1} parent=50 // pred_fallthru
              _
          $region51: #{tpu_custom_call.1} parent=44 // pred_fallthru
            _
          // Predicated region
          $region52: #{tpu_custom_call.1} parent=44 // pred_check
            %p287 = pneg %p283
          $region53: #{tpu_custom_call.1} parent=44 // pred_check_branch
            %289 = sbr.rel (%p287) target = $region55
          $region54: #{tpu_custom_call.1} parent=44 // pred_region
            %s290 = sshllo.u32 0, 1
            loop: start=0, step=1, limit=1
            $region56: #{tpu_custom_call.1} parent=54 // loop_pre_header
              _
            $region57: #{tpu_custom_call.1} parent=54 // loop_header
              %s292 = sphi 0, %s296
              %p293 = scmp.ge.s32.totalorder %s292, 1
              %s297 = sphi %s280, %s280
              %s298 = sphi %s281, %s281
            $region58: #{tpu_custom_call.1} parent=54 // loop_header_branch
              %295 = sbr.rel (%p293) target = $region62
            $region59: #{tpu_custom_call.1} parent=54 // loop_body
              %v299 = vld [vmem:[%s297] sm:%s290]
              %300 = vst [vmem:[%s298] sm:%s290] %v299
            $region60: #{tpu_custom_call.1} parent=54 // loop_footer
              %s296 = sadd.s32 1, %s292
            $region61: #{tpu_custom_call.1} parent=54 // loop_footer_branch
              %291 = sbr.rel target = $region57
            $region62: #{tpu_custom_call.1} parent=54 // loop_exit
              _
          $region55: #{tpu_custom_call.1} parent=44 // pred_fallthru
            _
          // Predicated region
          $region74: #{tpu_custom_call.1} parent=44 // pred_check
            _
          $region75: #{tpu_custom_call.1} parent=44 // pred_check_branch
            %324 = sbr.rel (0) target = $region77
          $region76: #{tpu_custom_call.1} parent=44 // pred_region
            %325 = vsyncadd [#allocation3], 16
          $region77: #{tpu_custom_call.1} parent=44 // pred_fallthru
            _
        $region45: #{tpu_custom_call.1} parent=39 // loop_footer
          %s277 = sadd.s32 1, %s273
        $region46: #{tpu_custom_call.1} parent=39 // loop_footer_branch
          %272 = sbr.rel target = $region42
        $region47: #{tpu_custom_call.1} parent=39 // loop_exit
          _
        %s326 = smul.u32 8, 1
        %s327 = sshll.u32 %s326, 4
        %328 = dma.done [#allocation3], %s327
        %v329 = vld [vmem:[#allocation2] sm:$0xff]
        %v330 = vld [vmem:[%s265] sm:$0xff]
        %v331 = vld [vmem:[%s260] sm:$0xff]
        %v332 = vlaneseq
        %v333 = vand.u32 %v332, 127
        %334 = vset.pattern.permute.xlu0 0
        %335 = vperm.xlu0 %334, %v331
        %v336 = vpop.permute.xlu0 %335
        %vm337 = vcmp.eq.s32.totalorder %v336, %v333
        %v338 = vsel %vm337, 1, 0
        %v339 = vcvt.s32.f32 %v338
        %v340 = vld [vmem:[%s4] sm:$0xff]
        %v341 = vld [vmem:[%s4 + $0x8] sm:$0xff]
        %vm342 = vcmask 130048
        %v344 = vsel %vm342, %v339, 0
        %346 = vmatprep.subr.mxu0 0.0
        %347 = vmatpush1.msra.mxu0 %v340
        %348 = vmatprep.subr.mxu0 0.0
        %349 = vmatpush1.msra.mxu0 %v341
        %350 = vmatprep.subr.mxu0 0.0
        %351 = vmatpush1.msra.mxu0 0.0
        %352 = vmatprep.subr.mxu0 0.0
        %353 = vmatpush1.msra.mxu0 0.0
        %354 = vmatprep.subr.mxu0 0.0
        %355 = vmatpush1.msra.mxu0 0.0
        %356 = vmatprep.subr.mxu0 0.0
        %357 = vmatpush1.msra.mxu0 0.0
        %358 = vmatprep.subr.mxu0 0.0
        %359 = vmatpush1.msra.mxu0 0.0
        %360 = vmatprep.subr.mxu0 0.0
        %361 = vmatpush1.msra.mxu0 0.0
        %362 = vmatprep.subr.mxu0 0.0
        %363 = vmatpush1.msra.mxu0 0.0
        %364 = vmatprep.subr.mxu0 0.0
        %365 = vmatpush1.msra.mxu0 0.0
        %366 = vmatprep.subr.mxu0 0.0
        %367 = vmatpush1.msra.mxu0 0.0
        %368 = vmatprep.subr.mxu0 0.0
        %369 = vmatpush1.msra.mxu0 0.0
        %370 = vmatprep.subr.mxu0 0.0
        %371 = vmatpush1.msra.mxu0 0.0
        %372 = vmatprep.subr.mxu0 0.0
        %373 = vmatpush1.msra.mxu0 0.0
        %374 = vmatprep.subr.mxu0 0.0
        %375 = vmatpush1.msra.mxu0 0.0
        %376 = vmatprep.subr.mxu0 0.0
        %377 = vmatpush1.msra.mxu0 0.0
        %378 = vmatprep.subr.mxu0 0.0
        %379 = vmatpush1.msra.mxu0 0.0
        %380 = vmatprep.subr.mxu0 0.0
        %381 = vmatpush1.msra.mxu0 0.0
        %382 = vmatprep.subr.mxu0 0.0
        %383 = vmatpush1.msra.mxu0 0.0
        %384 = vmatprep.subr.mxu0 0.0
        %385 = vmatpush1.msra.mxu0 0.0
        %386 = vmatprep.subr.mxu0 0.0
        %387 = vmatpush1.msra.mxu0 0.0
        %388 = vmatprep.subr.mxu0 0.0
        %389 = vmatpush1.msra.mxu0 0.0
        %390 = vmatprep.subr.mxu0 0.0
        %391 = vmatpush1.msra.mxu0 0.0
        %392 = vmatprep.subr.mxu0 0.0
        %393 = vmatpush1.msra.mxu0 0.0
        %394 = vmatprep.subr.mxu0 0.0
        %395 = vmatpush1.msra.mxu0 0.0
        %396 = vmatprep.subr.mxu0 0.0
        %397 = vmatpush1.msra.mxu0 0.0
        %398 = vmatprep.subr.mxu0 0.0
        %399 = vmatpush1.msra.mxu0 0.0
        %400 = vmatprep.subr.mxu0 0.0
        %401 = vmatpush1.msra.mxu0 0.0
        %402 = vmatprep.subr.mxu0 0.0
        %403 = vmatpush1.msra.mxu0 0.0
        %404 = vmatprep.subr.mxu0 0.0
        %405 = vmatpush1.msra.mxu0 0.0
        %406 = vmatprep.subr.mxu0 0.0
        %407 = vmatpush1.msra.mxu0 0.0
        %408 = vmatprep.subr.mxu0 0.0
        %409 = vmatpush1.msra.mxu0 0.0
        %410 = vmatprep.mubr.f32.mxu0 0.0
        %411 = vmatmul.mubr.f32.gmra.mrb[0].mxu0 %v344
        %v412 = vpop.f32.mrb[0].mxu0
        %v413 = vadd.f32 0.0, %v412
        %v414 = vpop.f32.mrb[0].mxu0
        %415 = vdwg.mxu0
        %v416 = vadd.f32 %v329, %v330
        %v417 = vadd.f32 %v416, %v413
        %vm418 = vcmask 261120
        %v419 = vsel %vm418, %v417, 0.0
        %420 = vadd.xlane.f32.xlu0 %v419
        %v421 = vpop.xlane.xlu0 %420
        %v422 = vrcp.pop 32.0
        %v423 = vmul.f32 %v421, %v422
        %v424 = vsub.f32 %v417, %v423
        %v425 = vmul.f32 %v424, %v424
        %v426 = vsel %vm418, %v425, 0.0
        %427 = vadd.xlane.f32.xlu0 %v426
        %v428 = vpop.xlane.xlu0 %427
        %v429 = vmul.f32 %v428, %v422
        %v430 = vadd.f32 %v429, 1e-12
        %v431 = vrsqrt.pop %v430
        %v432 = vmul.f32 %v424, %v431
        %v434 = vlaneseq
        %v435 = vshrl.u32 %v434, 7
        %v436 = vsub.s32 0, %v435
        %v437 = vrot.slane %v270, %v436
        %v439 = vmul.f32 %v432, %v437
        %v441 = vlaneseq
        %v442 = vshrl.u32 %v441, 7
        %v443 = vsub.s32 0, %v442
        %v444 = vrot.slane %v271, %v443
        %v446 = vadd.f32 %v439, %v444
        %447 = vst.msk [vmem:[%s255] sm:$0xff] %vm418, %v446
        %s448 = sand.u32 %s166, 1
        %s449 = scalar_lea.sflag [#allocation7], %s448
        %s450 = sand.u32 %s166, 1
        %s451 = smul.addr %s450, 8
        %s452 = scalar_lea.vmem [#allocation6], %s451
        // Predicated region
        $region78: #{tpu_custom_call.1} parent=39 // pred_check
          %p453 = pneg %p176
        $region79: #{tpu_custom_call.1} parent=39 // pred_check_branch
          %455 = sbr.rel (%p453) target = $region81
        $region80: #{tpu_custom_call.1} parent=39 // pred_region
          %s456 = sadd.s32 %s31, %s32
          %s458 = ssub.s32 128, 128
          %459 = vsyncadd %s449, %s458
          %s460 = smul.addr %s456, 128
          %s461 = scalar_lea.hbm %s7, %s460
          %s463 = sshll.u32 %s452, 4
          %s464 = int_to_ptr.vmem [resolvable:$true] %s463
          %466 = dma.vmem_to_hbm [thread:$0]  %s464, 128, %s461, %s449
        $region81: #{tpu_custom_call.1} parent=39 // pred_fallthru
          _
      $region40: #{tpu_custom_call.1} parent=5 // pred_fallthru
        _
      %p467 = scmp.le.s32.totalorder 2, %s22
      // Predicated region
      $region82: #{tpu_custom_call.1} parent=5 // pred_check
        %p468 = pneg %p467
      $region83: #{tpu_custom_call.1} parent=5 // pred_check_branch
        %470 = sbr.rel (%p468) target = $region85
      $region84: #{tpu_custom_call.1} parent=5 // pred_region
        %s471 = ssub.s32 %s22, 2
        // Predicated region
        $region86: #{tpu_custom_call.1} parent=84 // pred_check
          %p472 = pneg %p182
        $region87: #{tpu_custom_call.1} parent=84 // pred_check_branch
          %474 = sbr.rel (%p472) target = $region89
        $region88: #{tpu_custom_call.1} parent=84 // pred_region
          %s475 = sand.u32 %s167, 1
          %s476 = scalar_lea.sflag [#allocation7], %s475
          %s477 = sand.u32 %s167, 1
          %s478 = smul.addr %s477, 8
          %s479 = scalar_lea.vmem [#allocation6], %s478
          %480 = dma.done %s476, 128
        $region89: #{tpu_custom_call.1} parent=84 // pred_fallthru
          _
      $region85: #{tpu_custom_call.1} parent=5 // pred_fallthru
        _
    $region6: #{tpu_custom_call.1} parent=1 // loop_footer
      %s26 = sadd.s32 1, %s22
    $region7: #{tpu_custom_call.1} parent=1 // loop_footer_branch
      %21 = sbr.rel target = $region3
    $region8: #{tpu_custom_call.1} parent=1 // loop_exit
      _
    %481 = vsyncpa [#allocation7], 1
    %s482 = scalar_lea.sflag [#allocation7], 1
    %483 = vsyncpa %s482, 1
  %484 = vsyncmov [#allocation3]
  %s485 = vpop.sfrf %484
  %p486 = scmp.eq.s32.totalorder %s485, 0
  %p487 = pneg %p486
  %489 = shalt.err (%p487)

</llo_original>
